<compile_context>
chip_gen: v7x
topology: tpu7x:2x2x1
jax: 0.10.0
libtpu: 0.0.40
codegen_flags: <defaults>
</compile_context>

<pallas_src>
import functools

import jax
import jax.numpy as jnp
from jax import lax
from jax.experimental import pallas as pl
from jax.experimental.pallas import tpu as pltpu

ALPHA = 0.1
V_SPAN = 2.0  # (v_M - v_m) = 1 - (-1)


def _deep_speaker_loss_kernel(y_ref, out_ref, *, gram_dtype):
    y = y_ref[...]                               # input, original dtype
    n, d_feat = y.shape
    s = n // 3

    # MXU operand: bf16 fast path by default, or original dtype when
    # gram_dtype is None (exact f32 Gram for f32 callers).
    y_mxu = y if gram_dtype is None else y.astype(gram_dtype)

    # ---- single (3s x 3s) Gram, f32 accumulation ----
    # NOTE: (((1,),(1,)), ...) is the "NT" matmul the MXU handles with its
    # transposed weight-load path; checked so no extra vxpose pass is needed.
    gram = lax.dot_general(
        y_mxu, y_mxu, (((1,), (1,)), ((), ())),
        preferred_element_type=jnp.float32,
    )                                            # (3s, 3s) f32

    row = lax.broadcasted_iota(jnp.int32, (n, n), 0)
    col = lax.broadcasted_iota(jnp.int32, (n, n), 1)

    # Per-row squared norms straight off the Gram diagonal.  With sq taken
    # from gram, d2's diagonal is *exactly* zero, so no diag-zeroing select
    # is needed before the sqrt — only the cancellation clamp.
    sq = jnp.sum(jnp.where(row == col, gram, 0.0), axis=1, keepdims=True)
    d2 = jnp.maximum(sq + jnp.transpose(sq) - 2.0 * gram, 0.0)
    dist = jnp.sqrt(d2)                          # (3s, 3s), diag == 0

    # ---- column-block row sums of the distance matrix (single dist read) ----
    if s % 128 == 0:
        # Lane-aligned static slices: no iota, no selects.
        rs_a = jnp.sum(dist[:, :s], axis=1, keepdims=True)
        rs_p = jnp.sum(dist[:, s:2 * s], axis=1, keepdims=True)
        rs_n = jnp.sum(dist[:, 2 * s:], axis=1, keepdims=True)
    else:
        # One unmasked reduce + two masked; third block by subtraction.
        rs_tot = jnp.sum(dist, axis=1, keepdims=True)
        rs_a = jnp.sum(jnp.where(col < s, dist, 0.0), axis=1, keepdims=True)
        rs_p = jnp.sum(jnp.where((col >= s) & (col < 2 * s), dist, 0.0),
                       axis=1, keepdims=True)
        rs_n = rs_tot - rs_a - rs_p

    s_aa = jnp.sum(rs_a[:s])          # full A-A block sum (diag = 0)
    s_ap = jnp.sum(rs_p[:s])          # A-P rectangular block
    s_an = jnp.sum(rs_n[:s])          # A-N rectangular block
    s_pp = jnp.sum(rs_p[s:2 * s])     # full P-P block sum
    s_pn = jnp.sum(rs_n[s:2 * s])     # P-N rectangular block
    s_nn = jnp.sum(rs_n[2 * s:])      # full N-N block sum

    # ed1 over t1 = [A; P]  (2s rows, C(2s,2) unordered pairs)
    pairs1 = s * (2 * s - 1)
    ed1 = (0.5 * (s_aa + s_pp) + s_ap) / pairs1
    # ed2 over t2 = [A; P; A; N]  (4s rows); duplicated-anchor self pairs = 0
    pairs2 = 2 * s * (4 * s - 1)
    ed2 = (2.0 * s_aa + 0.5 * (s_pp + s_nn)
           + 2.0 * s_ap + 2.0 * s_an + s_pn) / pairs2

    # ---- f32 only where needed: the three (s, D) slices ----
    a32 = y[:s].astype(jnp.float32)
    p32 = y[s:2 * s].astype(jnp.float32)
    n32 = y[2 * s:].astype(jnp.float32)

    # Unbiased element-wise variances via per-block sum / sum-of-squares
    # (sum-of-squares reused from the Gram diagonal).
    sum_a = jnp.sum(a32)
    sum_p = jnp.sum(p32)
    sum_n = jnp.sum(n32)
    ssq_a = jnp.sum(sq[:s])
    ssq_p = jnp.sum(sq[s:2 * s])
    ssq_n = jnp.sum(sq[2 * s:])

    n1 = 2 * s * d_feat
    n2 = 4 * s * d_feat
    sum1 = sum_a + sum_p
    ssq1 = ssq_a + ssq_p
    var1 = (ssq1 - sum1 * sum1 / n1) / (n1 - 1)
    sum2 = 2.0 * sum_a + sum_p + sum_n
    ssq2 = 2.0 * ssq_a + ssq_p + ssq_n
    var2 = (ssq2 - sum2 * sum2 / n2) / (n2 - 1)

    # ---- per-triplet distances (exact, from direct f32 differences) ----
    norm_ap = jnp.sqrt(jnp.sum((a32 - p32) ** 2, axis=-1, keepdims=True))
    norm_an = jnp.sqrt(jnp.sum((a32 - n32) ** 2, axis=-1, keepdims=True))

    diem_ap = V_SPAN * (norm_ap - ed1) / var1
    diem_an = V_SPAN * (norm_an - ed2) / var2

    out_ref[0, 0] = jnp.mean(jnp.maximum(diem_ap - diem_an + ALPHA, 0.0))


def deep_speaker_loss(y_true, y_pred, *, gram_dtype=jnp.bfloat16):
    """DeepSpeakerLoss forward.  gram_dtype=None keeps the Gram in the input
    dtype (exact); the default bf16 takes the fast MXU path for f32 inputs."""
    del y_true  # unused by the reference forward
    n, d = y_pred.shape

    # VMEM budget from the padded (3s)^2 f32 temporaries (gram, d2/dist,
    # masked temps) + input buffers.  Raises v5e/v6e scoped defaults; capped
    # at v7x's 64 MiB physical so one plan works on every generation.
    n_sub = ((n + 7) // 8) * 8
    n_lane = ((n + 127) // 128) * 128
    d_lane = ((d + 127) // 128) * 128
    nn_f32 = n_sub * n_lane * 4
    vmem_needed = 6 * nn_f32 + 4 * n_sub * d_lane * 4 + (2 << 20)
    vmem_limit = min(max(vmem_needed, 32 << 20), 64 << 20)

    cost = pl.CostEstimate(
        flops=2 * n * n * d + 16 * n * n + 8 * n * d,
        transcendentals=n * n + 2 * (n // 3),     # sqrt of dist + triplet norms
        bytes_accessed=n * d * y_pred.dtype.itemsize + 4,
    )

    kernel = functools.partial(_deep_speaker_loss_kernel, gram_dtype=gram_dtype)
    out = pl.pallas_call(
        kernel,
        out_shape=jax.ShapeDtypeStruct((1, 1), jnp.float32),
        in_specs=[pl.BlockSpec(memory_space=pltpu.VMEM)],
        out_specs=pl.BlockSpec(memory_space=pltpu.SMEM),
        compiler_params=pltpu.CompilerParams(vmem_limit_bytes=vmem_limit),
        cost_estimate=cost,
    )(y_pred)
    return out[0, 0]


def _reference_loss(y_pred):
    """Pure-JAX reference mirroring the PyTorch semantics (fresh module)."""
    s = y_pred.shape[0] // 3
    a, p, n = y_pred[:s], y_pred[s:2 * s], y_pred[2 * s:]

    def diem(t, b1, b2):
        nrows = t.shape[0]
        mean = jnp.mean(t)
        var = jnp.sum((t - mean) ** 2) / (t.size - 1)
        diff = t[:, None, :] - t[None, :, :]
        dist = jnp.sqrt(jnp.sum(diff ** 2, axis=-1))
        iu = jnp.triu_indices(nrows, 1)
        ed = jnp.mean(dist[iu])
        return V_SPAN * (jnp.linalg.norm(b1 - b2, axis=1) - ed) / var

    d_ap = diem(jnp.concatenate([a, p], 0), a, p)
    d_an = diem(jnp.concatenate([a, p, a, n], 0), a, n)
    return jnp.mean(jnp.maximum(d_ap - d_an + ALPHA, 0.0))


if __name__ == "__main__":
    key = jax.random.PRNGKey(0)
    split, dim = 8, 32
    y_pred = jax.random.normal(key, (3 * split, dim), dtype=jnp.float32)
    y_true = jnp.zeros((3 * split,), dtype=jnp.float32)  # ignored by the loss

    ref = _reference_loss(y_pred)

    # Exact path: Gram kept in the input dtype (f32).
    loss_exact = jax.block_until_ready(
        deep_speaker_loss(y_true, y_pred, gram_dtype=None))
    assert jnp.allclose(loss_exact, ref, rtol=1e-2, atol=5e-3), (loss_exact, ref)

    # Fast path (default): bf16 MXU operand for the Gram only.
    loss_fast = jax.block_until_ready(deep_speaker_loss(y_true, y_pred))
    assert jnp.allclose(loss_fast, ref, rtol=5e-2, atol=2e-2), (loss_fast, ref)

    print("KERNEL_OK")
</pallas_src>

<mosaic_0001>
module attributes {stable_mosaic.version = 11 : i64} {
  func.func @_deep_speaker_loss_kernel(%arg0: memref<24x32xf32, #tpu.memory_space<vmem>>, %arg1: memref<1x1xf32, #tpu.memory_space<smem>>) attributes {dimension_semantics = [], scalar_prefetch = 0 : i64, scratch_operands = 0 : i64, tpu.core_type = #tpu.core_type<tc>} {
    %c0 = arith.constant 0 : index
    %c0_0 = arith.constant 0 : index
    %0 = vector.load %arg0[%c0, %c0_0] : memref<24x32xf32, #tpu.memory_space<vmem>>, vector<24x32xf32>
    %cst = arith.constant dense<0.000000e+00> : vector<24x24xf32>
    %1 = tpu.matmul %0, %0, %cst {dimension_numbers = #tpu.dot_dimension_numbers<[1], [1], [0], [0], [0, 0, 1, 0], [], []>} : vector<24x32xf32>, vector<24x32xf32>, vector<24x24xf32> -> vector<24x24xf32>
    %2 = tpu.iota {dimensions = array<i32: 0>} : vector<24x24xi32>
    %3 = tpu.iota {dimensions = array<i32: 1>} : vector<24x24xi32>
    %4 = arith.cmpi eq, %2, %3 : vector<24x24xi32>
    %cst_1 = arith.constant 0.000000e+00 : f32
    %5 = vector.broadcast %cst_1 : f32 to vector<24x24xf32>
    %6 = arith.select %4, %1, %5 : vector<24x24xi1>, vector<24x24xf32>
    %cst_2 = arith.constant dense<0.000000e+00> : vector<24xf32>
    %7 = vector.multi_reduction <add>, %6, %cst_2 [1] : vector<24x24xf32> to vector<24xf32>
    %8 = vector.shape_cast %7 : vector<24xf32> to vector<24x1xf32>
    %9 = tpu.transpose %8, [1, 0] : vector<24x1xf32> -> vector<1x24xf32>
    %10 = vector.broadcast %8 : vector<24x1xf32> to vector<24x24xf32>
    %11 = vector.broadcast %9 : vector<1x24xf32> to vector<24x24xf32>
    %12 = arith.addf %10, %11 : vector<24x24xf32>
    %cst_3 = arith.constant 2.000000e+00 : f32
    %13 = vector.broadcast %cst_3 : f32 to vector<24x24xf32>
    %14 = arith.mulf %13, %1 : vector<24x24xf32>
    %15 = arith.subf %12, %14 : vector<24x24xf32>
    %cst_4 = arith.constant 0.000000e+00 : f32
    %16 = vector.broadcast %cst_4 : f32 to vector<24x24xf32>
    %17 = arith.maximumf %15, %16 : vector<24x24xf32>
    %18 = math.sqrt %17 : vector<24x24xf32>
    %cst_5 = arith.constant dense<0.000000e+00> : vector<24xf32>
    %19 = vector.multi_reduction <add>, %18, %cst_5 [1] : vector<24x24xf32> to vector<24xf32>
    %20 = vector.shape_cast %19 : vector<24xf32> to vector<24x1xf32>
    %c8_i32 = arith.constant 8 : i32
    %21 = vector.broadcast %c8_i32 : i32 to vector<24x24xi32>
    %22 = arith.cmpi slt, %3, %21 : vector<24x24xi32>
    %cst_6 = arith.constant 0.000000e+00 : f32
    %23 = vector.broadcast %cst_6 : f32 to vector<24x24xf32>
    %24 = arith.select %22, %18, %23 : vector<24x24xi1>, vector<24x24xf32>
    %cst_7 = arith.constant dense<0.000000e+00> : vector<24xf32>
    %25 = vector.multi_reduction <add>, %24, %cst_7 [1] : vector<24x24xf32> to vector<24xf32>
    %26 = vector.shape_cast %25 : vector<24xf32> to vector<24x1xf32>
    %c8_i32_8 = arith.constant 8 : i32
    %27 = vector.broadcast %c8_i32_8 : i32 to vector<24x24xi32>
    %28 = arith.cmpi sge, %3, %27 : vector<24x24xi32>
    %c16_i32 = arith.constant 16 : i32
    %29 = vector.broadcast %c16_i32 : i32 to vector<24x24xi32>
    %30 = arith.cmpi slt, %3, %29 : vector<24x24xi32>
    %31 = arith.andi %28, %30 : vector<24x24xi1>
    %cst_9 = arith.constant 0.000000e+00 : f32
    %32 = vector.broadcast %cst_9 : f32 to vector<24x24xf32>
    %33 = arith.select %31, %18, %32 : vector<24x24xi1>, vector<24x24xf32>
    %cst_10 = arith.constant dense<0.000000e+00> : vector<24xf32>
    %34 = vector.multi_reduction <add>, %33, %cst_10 [1] : vector<24x24xf32> to vector<24xf32>
    %35 = vector.shape_cast %34 : vector<24xf32> to vector<24x1xf32>
    %36 = arith.subf %20, %26 : vector<24x1xf32>
    %37 = arith.subf %36, %35 : vector<24x1xf32>
    %38 = vector.extract_strided_slice %26 {offsets = [0, 0], sizes = [8, 1], strides = [1, 1]} : vector<24x1xf32> to vector<8x1xf32>
    %39 = vector.shape_cast %38 : vector<8x1xf32> to vector<1x8x1xf32>
    %cst_11 = arith.constant dense<0.000000e+00> : vector<1xf32>
    %40 = vector.multi_reduction <add>, %39, %cst_11 [1, 2] : vector<1x8x1xf32> to vector<1xf32>
    %41 = vector.shape_cast %40 : vector<1xf32> to vector<1x1x1xf32>
    %42 = vector.extract %41[0, 0, 0] : f32 from vector<1x1x1xf32>
    %43 = vector.extract_strided_slice %35 {offsets = [0, 0], sizes = [8, 1], strides = [1, 1]} : vector<24x1xf32> to vector<8x1xf32>
    %44 = vector.shape_cast %43 : vector<8x1xf32> to vector<1x8x1xf32>
    %cst_12 = arith.constant dense<0.000000e+00> : vector<1xf32>
    %45 = vector.multi_reduction <add>, %44, %cst_12 [1, 2] : vector<1x8x1xf32> to vector<1xf32>
    %46 = vector.shape_cast %45 : vector<1xf32> to vector<1x1x1xf32>
    %47 = vector.extract %46[0, 0, 0] : f32 from vector<1x1x1xf32>
    %48 = vector.extract_strided_slice %37 {offsets = [0, 0], sizes = [8, 1], strides = [1, 1]} : vector<24x1xf32> to vector<8x1xf32>
    %49 = vector.shape_cast %48 : vector<8x1xf32> to vector<1x8x1xf32>
    %cst_13 = arith.constant dense<0.000000e+00> : vector<1xf32>
    %50 = vector.multi_reduction <add>, %49, %cst_13 [1, 2] : vector<1x8x1xf32> to vector<1xf32>
    %51 = vector.shape_cast %50 : vector<1xf32> to vector<1x1x1xf32>
    %52 = vector.extract %51[0, 0, 0] : f32 from vector<1x1x1xf32>
    %53 = vector.extract_strided_slice %35 {offsets = [8, 0], sizes = [8, 1], strides = [1, 1]} : vector<24x1xf32> to vector<8x1xf32>
    %54 = vector.shape_cast %53 : vector<8x1xf32> to vector<1x8x1xf32>
    %cst_14 = arith.constant dense<0.000000e+00> : vector<1xf32>
    %55 = vector.multi_reduction <add>, %54, %cst_14 [1, 2] : vector<1x8x1xf32> to vector<1xf32>
    %56 = vector.shape_cast %55 : vector<1xf32> to vector<1x1x1xf32>
    %57 = vector.extract %56[0, 0, 0] : f32 from vector<1x1x1xf32>
    %58 = vector.extract_strided_slice %37 {offsets = [8, 0], sizes = [8, 1], strides = [1, 1]} : vector<24x1xf32> to vector<8x1xf32>
    %59 = vector.shape_cast %58 : vector<8x1xf32> to vector<1x8x1xf32>
    %cst_15 = arith.constant dense<0.000000e+00> : vector<1xf32>
    %60 = vector.multi_reduction <add>, %59, %cst_15 [1, 2] : vector<1x8x1xf32> to vector<1xf32>
    %61 = vector.shape_cast %60 : vector<1xf32> to vector<1x1x1xf32>
    %62 = vector.extract %61[0, 0, 0] : f32 from vector<1x1x1xf32>
    %63 = vector.extract_strided_slice %37 {offsets = [16, 0], sizes = [8, 1], strides = [1, 1]} : vector<24x1xf32> to vector<8x1xf32>
    %64 = vector.shape_cast %63 : vector<8x1xf32> to vector<1x8x1xf32>
    %cst_16 = arith.constant dense<0.000000e+00> : vector<1xf32>
    %65 = vector.multi_reduction <add>, %64, %cst_16 [1, 2] : vector<1x8x1xf32> to vector<1xf32>
    %66 = vector.shape_cast %65 : vector<1xf32> to vector<1x1x1xf32>
    %67 = vector.extract %66[0, 0, 0] : f32 from vector<1x1x1xf32>
    %68 = arith.addf %42, %57 : f32
    %cst_17 = arith.constant 5.000000e-01 : f32
    %69 = arith.mulf %cst_17, %68 : f32
    %70 = arith.addf %69, %47 : f32
    %cst_18 = arith.constant 1.200000e+02 : f32
    %71 = arith.divf %70, %cst_18 : f32
    %cst_19 = arith.constant 2.000000e+00 : f32
    %72 = arith.mulf %cst_19, %42 : f32
    %73 = arith.addf %57, %67 : f32
    %cst_20 = arith.constant 5.000000e-01 : f32
    %74 = arith.mulf %cst_20, %73 : f32
    %75 = arith.addf %72, %74 : f32
    %cst_21 = arith.constant 2.000000e+00 : f32
    %76 = arith.mulf %cst_21, %47 : f32
    %77 = arith.addf %75, %76 : f32
    %cst_22 = arith.constant 2.000000e+00 : f32
    %78 = arith.mulf %cst_22, %52 : f32
    %79 = arith.addf %77, %78 : f32
    %80 = arith.addf %79, %62 : f32
    %cst_23 = arith.constant 4.960000e+02 : f32
    %81 = arith.divf %80, %cst_23 : f32
    %82 = vector.extract_strided_slice %0 {offsets = [0, 0], sizes = [8, 32], strides = [1, 1]} : vector<24x32xf32> to vector<8x32xf32>
    %83 = vector.extract_strided_slice %0 {offsets = [8, 0], sizes = [8, 32], strides = [1, 1]} : vector<24x32xf32> to vector<8x32xf32>
    %84 = vector.extract_strided_slice %0 {offsets = [16, 0], sizes = [8, 32], strides = [1, 1]} : vector<24x32xf32> to vector<8x32xf32>
    %85 = vector.shape_cast %82 : vector<8x32xf32> to vector<1x8x32xf32>
    %cst_24 = arith.constant dense<0.000000e+00> : vector<1xf32>
    %86 = vector.multi_reduction <add>, %85, %cst_24 [1, 2] : vector<1x8x32xf32> to vector<1xf32>
    %87 = vector.shape_cast %86 : vector<1xf32> to vector<1x1x1xf32>
    %88 = vector.extract %87[0, 0, 0] : f32 from vector<1x1x1xf32>
    %89 = vector.shape_cast %83 : vector<8x32xf32> to vector<1x8x32xf32>
    %cst_25 = arith.constant dense<0.000000e+00> : vector<1xf32>
    %90 = vector.multi_reduction <add>, %89, %cst_25 [1, 2] : vector<1x8x32xf32> to vector<1xf32>
    %91 = vector.shape_cast %90 : vector<1xf32> to vector<1x1x1xf32>
    %92 = vector.extract %91[0, 0, 0] : f32 from vector<1x1x1xf32>
    %93 = vector.shape_cast %84 : vector<8x32xf32> to vector<1x8x32xf32>
    %cst_26 = arith.constant dense<0.000000e+00> : vector<1xf32>
    %94 = vector.multi_reduction <add>, %93, %cst_26 [1, 2] : vector<1x8x32xf32> to vector<1xf32>
    %95 = vector.shape_cast %94 : vector<1xf32> to vector<1x1x1xf32>
    %96 = vector.extract %95[0, 0, 0] : f32 from vector<1x1x1xf32>
    %97 = vector.extract_strided_slice %8 {offsets = [0, 0], sizes = [8, 1], strides = [1, 1]} : vector<24x1xf32> to vector<8x1xf32>
    %98 = vector.shape_cast %97 : vector<8x1xf32> to vector<1x8x1xf32>
    %cst_27 = arith.constant dense<0.000000e+00> : vector<1xf32>
    %99 = vector.multi_reduction <add>, %98, %cst_27 [1, 2] : vector<1x8x1xf32> to vector<1xf32>
    %100 = vector.shape_cast %99 : vector<1xf32> to vector<1x1x1xf32>
    %101 = vector.extract %100[0, 0, 0] : f32 from vector<1x1x1xf32>
    %102 = vector.extract_strided_slice %8 {offsets = [8, 0], sizes = [8, 1], strides = [1, 1]} : vector<24x1xf32> to vector<8x1xf32>
    %103 = vector.shape_cast %102 : vector<8x1xf32> to vector<1x8x1xf32>
    %cst_28 = arith.constant dense<0.000000e+00> : vector<1xf32>
    %104 = vector.multi_reduction <add>, %103, %cst_28 [1, 2] : vector<1x8x1xf32> to vector<1xf32>
    %105 = vector.shape_cast %104 : vector<1xf32> to vector<1x1x1xf32>
    %106 = vector.extract %105[0, 0, 0] : f32 from vector<1x1x1xf32>
    %107 = vector.extract_strided_slice %8 {offsets = [16, 0], sizes = [8, 1], strides = [1, 1]} : vector<24x1xf32> to vector<8x1xf32>
    %108 = vector.shape_cast %107 : vector<8x1xf32> to vector<1x8x1xf32>
    %cst_29 = arith.constant dense<0.000000e+00> : vector<1xf32>
    %109 = vector.multi_reduction <add>, %108, %cst_29 [1, 2] : vector<1x8x1xf32> to vector<1xf32>
    %110 = vector.shape_cast %109 : vector<1xf32> to vector<1x1x1xf32>
    %111 = vector.extract %110[0, 0, 0] : f32 from vector<1x1x1xf32>
    %112 = arith.addf %88, %92 : f32
    %113 = arith.addf %101, %106 : f32
    %114 = arith.mulf %112, %112 : f32
    %cst_30 = arith.constant 5.120000e+02 : f32
    %115 = arith.divf %114, %cst_30 : f32
    %116 = arith.subf %113, %115 : f32
    %cst_31 = arith.constant 5.110000e+02 : f32
    %117 = arith.divf %116, %cst_31 : f32
    %cst_32 = arith.constant 2.000000e+00 : f32
    %118 = arith.mulf %cst_32, %88 : f32
    %119 = arith.addf %118, %92 : f32
    %120 = arith.addf %119, %96 : f32
    %cst_33 = arith.constant 2.000000e+00 : f32
    %121 = arith.mulf %cst_33, %101 : f32
    %122 = arith.addf %121, %106 : f32
    %123 = arith.addf %122, %111 : f32
    %124 = arith.mulf %120, %120 : f32
    %cst_34 = arith.constant 1.024000e+03 : f32
    %125 = arith.divf %124, %cst_34 : f32
    %126 = arith.subf %123, %125 : f32
    %cst_35 = arith.constant 1.023000e+03 : f32
    %127 = arith.divf %126, %cst_35 : f32
    %128 = arith.subf %82, %83 : vector<8x32xf32>
    %129 = arith.mulf %128, %128 : vector<8x32xf32>
    %cst_36 = arith.constant dense<0.000000e+00> : vector<8xf32>
    %130 = vector.multi_reduction <add>, %129, %cst_36 [1] : vector<8x32xf32> to vector<8xf32>
    %131 = vector.shape_cast %130 : vector<8xf32> to vector<8x1xf32>
    %132 = math.sqrt %131 : vector<8x1xf32>
    %133 = arith.subf %82, %84 : vector<8x32xf32>
    %134 = arith.mulf %133, %133 : vector<8x32xf32>
    %cst_37 = arith.constant dense<0.000000e+00> : vector<8xf32>
    %135 = vector.multi_reduction <add>, %134, %cst_37 [1] : vector<8x32xf32> to vector<8xf32>
    %136 = vector.shape_cast %135 : vector<8xf32> to vector<8x1xf32>
    %137 = math.sqrt %136 : vector<8x1xf32>
    %138 = vector.broadcast %71 : f32 to vector<8x1xf32>
    %139 = arith.subf %132, %138 : vector<8x1xf32>
    %cst_38 = arith.constant 2.000000e+00 : f32
    %140 = vector.broadcast %cst_38 : f32 to vector<8x1xf32>
    %141 = arith.mulf %140, %139 : vector<8x1xf32>
    %142 = vector.broadcast %117 : f32 to vector<8x1xf32>
    %143 = arith.divf %141, %142 : vector<8x1xf32>
    %144 = vector.broadcast %81 : f32 to vector<8x1xf32>
    %145 = arith.subf %137, %144 : vector<8x1xf32>
    %cst_39 = arith.constant 2.000000e+00 : f32
    %146 = vector.broadcast %cst_39 : f32 to vector<8x1xf32>
    %147 = arith.mulf %146, %145 : vector<8x1xf32>
    %148 = vector.broadcast %127 : f32 to vector<8x1xf32>
    %149 = arith.divf %147, %148 : vector<8x1xf32>
    %150 = arith.subf %143, %149 : vector<8x1xf32>
    %cst_40 = arith.constant 1.000000e-01 : f32
    %151 = vector.broadcast %cst_40 : f32 to vector<8x1xf32>
    %152 = arith.addf %150, %151 : vector<8x1xf32>
    %cst_41 = arith.constant 0.000000e+00 : f32
    %153 = vector.broadcast %cst_41 : f32 to vector<8x1xf32>
    %154 = arith.maximumf %152, %153 : vector<8x1xf32>
    %155 = vector.shape_cast %154 : vector<8x1xf32> to vector<1x8x1xf32>
    %cst_42 = arith.constant dense<0.000000e+00> : vector<1xf32>
    %156 = vector.multi_reduction <add>, %155, %cst_42 [1, 2] : vector<1x8x1xf32> to vector<1xf32>
    %157 = vector.shape_cast %156 : vector<1xf32> to vector<1x1x1xf32>
    %158 = vector.extract %157[0, 0, 0] : f32 from vector<1x1x1xf32>
    %cst_43 = arith.constant 8.000000e+00 : f32
    %159 = arith.divf %158, %cst_43 : f32
    %c0_44 = arith.constant 0 : index
    %c0_45 = arith.constant 0 : index
    %160 = memref.load %arg1[%c0_44, %c0_45] : memref<1x1xf32, #tpu.memory_space<smem>>
    memref.store %159, %arg1[%c0_44, %c0_45] : memref<1x1xf32, #tpu.memory_space<smem>>
    return
  }
}

</mosaic_0001>

<llo_original>
// kernel: tpu_custom_call.1
$region0: #{tpu_custom_call.1}
  #allocation0 [shape = 'u32[]', space=smem, size = 0x4, offset = 0x4, fixed_abs, tag = 'smem constant byte address 0x4 - core index']
  #allocation1 [shape = 'u32[144,128]{1,0:T(1,128)}', space=vmem, size = 0x12000, scoped, tag = 'internal scratch']
  %s0 = inlined_call_operand.hbm [shape: f32[24,32], index: 0, kind: input, shape index: {}]
  %s1 = inlined_call_operand.hbm [shape: f32[1,1], index: 1, kind: output, shape index: {}]
  %s2 = sld [smem:[#allocation0]]
  $region18: #{tpu_custom_call.1} parent=0
    _
  %s4 = ssub.s32 1, %s2
  %s5 = scalar_select 0, %s4, %s2
  $region1: #{tpu_custom_call.1} parent=0
    #allocation2 [shape = 'u8[12288]{0}', space=vmem, size = 0x3000, scoped, tag = 'input window, operand 0, single buffered']
    #allocation3 [shape = 's32[1]{0}', space=sflag, size = 0x4, scoped, tag = 'scoped memory for tpu_custom_call.1']
    #allocation4 [shape = 's32[1]{0}', space=sflag, size = 0x4, scoped, tag = 'scoped memory for tpu_custom_call.1']
    #allocation5 [shape = 'u8[512]{0}', space=smem, size = 0x200, scoped, tag = 'output window, operand 0, single buffered']
    %6 = vsyncpa [#allocation3], 0
    %7 = vsyncpa [#allocation4], 0
    // Predicated region
    $region2: #{tpu_custom_call.1} parent=1 // pred_check
      _
    $region3: #{tpu_custom_call.1} parent=1 // pred_check_branch
      %9 = sbr.rel (0) target = $region5
    $region4: #{tpu_custom_call.1} parent=1 // pred_region
      %s11 = ssub.s32 384, 384
      %12 = vsyncadd [#allocation3], %s11
      %s13 = sshll.u32 [#allocation2], 4
      %s14 = int_to_ptr.vmem [resolvable:$true] %s13
      %19 = dma.hbm_to_vmem [thread:$0]  %s0, 384, %s14, [#allocation3], 128, 128, 8
    $region5: #{tpu_custom_call.1} parent=1 // pred_fallthru
      _
    // Predicated region
    $region6: #{tpu_custom_call.1} parent=1 // pred_check
      _
    $region7: #{tpu_custom_call.1} parent=1 // pred_check_branch
      %21 = sbr.rel (0) target = $region9
    $region8: #{tpu_custom_call.1} parent=1 // pred_region
      %22 = dma.done [#allocation3], 384
    $region9: #{tpu_custom_call.1} parent=1 // pred_fallthru
      _
    %v23 = vld [vmem:[#allocation2] sm:$0xff]
    %v24 = vld [vmem:[#allocation2 + $0x8] sm:$0xff]
    %v25 = vld [vmem:[#allocation2 + $0x10] sm:$0xff]
    %vm26 = vcmask 261120
    %v28 = vsel %vm26, %v23, 0
    %v31 = vsel %vm26, %v24, 0
    %v34 = vsel %vm26, %v25, 0
    %36 = vmatprep.subr.mxu0 0.0
    %37 = vmatpush1.xpose.msra.mxu0 %v28
    %38 = vmatprep.subr.mxu0 0.0
    %39 = vmatpush1.xpose.msra.mxu0 %v31
    %40 = vmatprep.subr.mxu0 0.0
    %41 = vmatpush1.xpose.msra.mxu0 %v34
    %42 = vmatprep.subr.mxu0 0.0
    %43 = vmatpush1.xpose.msra.mxu0 0.0
    %44 = vmatprep.subr.mxu0 0.0
    %45 = vmatpush1.xpose.msra.mxu0 0.0
    %46 = vmatprep.subr.mxu0 0.0
    %47 = vmatpush1.xpose.msra.mxu0 0.0
    %48 = vmatprep.subr.mxu0 0.0
    %49 = vmatpush1.xpose.msra.mxu0 0.0
    %50 = vmatprep.subr.mxu0 0.0
    %51 = vmatpush1.xpose.msra.mxu0 0.0
    %52 = vmatprep.subr.mxu0 0.0
    %53 = vmatpush1.xpose.msra.mxu0 0.0
    %54 = vmatprep.subr.mxu0 0.0
    %55 = vmatpush1.xpose.msra.mxu0 0.0
    %56 = vmatprep.subr.mxu0 0.0
    %57 = vmatpush1.xpose.msra.mxu0 0.0
    %58 = vmatprep.subr.mxu0 0.0
    %59 = vmatpush1.xpose.msra.mxu0 0.0
    %60 = vmatprep.subr.mxu0 0.0
    %61 = vmatpush1.xpose.msra.mxu0 0.0
    %62 = vmatprep.subr.mxu0 0.0
    %63 = vmatpush1.xpose.msra.mxu0 0.0
    %64 = vmatprep.subr.mxu0 0.0
    %65 = vmatpush1.xpose.msra.mxu0 0.0
    %66 = vmatprep.subr.mxu0 0.0
    %67 = vmatpush1.xpose.msra.mxu0 0.0
    %68 = vmatprep.subr.mxu0 0.0
    %69 = vmatpush1.xpose.msra.mxu0 0.0
    %70 = vmatprep.subr.mxu0 0.0
    %71 = vmatpush1.xpose.msra.mxu0 0.0
    %72 = vmatprep.subr.mxu0 0.0
    %73 = vmatpush1.xpose.msra.mxu0 0.0
    %74 = vmatprep.subr.mxu0 0.0
    %75 = vmatpush1.xpose.msra.mxu0 0.0
    %76 = vmatprep.subr.mxu0 0.0
    %77 = vmatpush1.xpose.msra.mxu0 0.0
    %78 = vmatprep.subr.mxu0 0.0
    %79 = vmatpush1.xpose.msra.mxu0 0.0
    %80 = vmatprep.subr.mxu0 0.0
    %81 = vmatpush1.xpose.msra.mxu0 0.0
    %82 = vmatprep.subr.mxu0 0.0
    %83 = vmatpush1.xpose.msra.mxu0 0.0
    %84 = vmatprep.subr.mxu0 0.0
    %85 = vmatpush1.xpose.msra.mxu0 0.0
    %86 = vmatprep.subr.mxu0 0.0
    %87 = vmatpush1.xpose.msra.mxu0 0.0
    %88 = vmatprep.subr.mxu0 0.0
    %89 = vmatpush1.xpose.msra.mxu0 0.0
    %90 = vmatprep.subr.mxu0 0.0
    %91 = vmatpush1.xpose.msra.mxu0 0.0
    %92 = vmatprep.subr.mxu0 0.0
    %93 = vmatpush1.xpose.msra.mxu0 0.0
    %94 = vmatprep.subr.mxu0 0.0
    %95 = vmatpush1.xpose.msra.mxu0 0.0
    %96 = vmatprep.subr.mxu0 0.0
    %97 = vmatpush1.xpose.msra.mxu0 0.0
    %98 = vmatprep.subr.mxu0 0.0
    %99 = vmatpush1.xpose.msra.mxu0 0.0
    %100 = vmatprep.mubr.f32.mxu0 0.0
    %101 = vmatmul.mubr.f32.gmra.mrb[0].mxu0 %v28
    %v102 = vpop.f32.mrb[0].mxu0
    %v103 = vadd.f32 0.0, %v102
    %v104 = vpop.f32.mrb[0].mxu0
    %105 = vmatprep.mubr.f32.mxu0 0.0
    %106 = vmatmul.mubr.f32.gmra.mrb[0].mxu0 %v31
    %v107 = vpop.f32.mrb[0].mxu0
    %v108 = vadd.f32 0.0, %v107
    %v109 = vpop.f32.mrb[0].mxu0
    %110 = vmatprep.mubr.f32.mxu0 0.0
    %111 = vmatmul.mubr.f32.gmra.mrb[0].mxu0 %v34
    %v112 = vpop.f32.mrb[0].mxu0
    %v113 = vadd.f32 0.0, %v112
    %v114 = vpop.f32.mrb[0].mxu0
    %115 = vdwg.mxu0
    %v116 = vlaneseq
    %v117 = vshrl.u32 %v116, 7
    %v118 = vadd.s32 %v117, 8
    %v119 = vadd.s32 %v117, 16
    %v120 = vlaneseq
    %v121 = vand.u32 %v120, 127
    %vm122 = vcmp.eq.s32.totalorder %v117, %v121
    %vm123 = vcmp.eq.s32.totalorder %v118, %v121
    %vm124 = vcmp.eq.s32.totalorder %v119, %v121
    %v125 = vsel %vm122, %v103, 0.0
    %v126 = vsel %vm123, %v108, 0.0
    %v127 = vsel %vm124, %v113, 0.0
    %vm128 = vcmask 195584
    %v129 = vsel %vm128, %v125, 0.0
    %130 = vadd.xlane.f32.xlu0 %v129
    %v131 = vpop.xlane.xlu0 %130
    %v132 = vsel %vm128, %v126, 0.0
    %133 = vadd.xlane.f32.xlu0 %v132
    %v134 = vpop.xlane.xlu0 %133
    %v135 = vsel %vm128, %v127, 0.0
    %136 = vadd.xlane.f32.xlu0 %v135
    %v137 = vpop.xlane.xlu0 %136
    %138 = vxpose.xlu0.b32.start [1/16] %v131, 128
    %139 = vxpose.xlu0.b32.cont [2/16] %v134, 128
    %140 = vxpose.xlu0.b32.cont [3/16] %v137, 128
    %141 = vxpose.xlu0.b32.cont [4/16] 0.0, 128
    %142 = vxpose.xlu0.b32.cont [5/16] 0.0, 128
    %143 = vxpose.xlu0.b32.cont [6/16] 0.0, 128
    %144 = vxpose.xlu0.b32.cont [7/16] 0.0, 128
    %145 = vxpose.xlu0.b32.cont [8/16] 0.0, 128
    %146 = vxpose.xlu0.b32.cont [9/16] 0.0, 128
    %147 = vxpose.xlu0.b32.cont [10/16] 0.0, 128
    %148 = vxpose.xlu0.b32.cont [11/16] 0.0, 128
    %149 = vxpose.xlu0.b32.cont [12/16] 0.0, 128
    %150 = vxpose.xlu0.b32.cont [13/16] 0.0, 128
    %151 = vxpose.xlu0.b32.cont [14/16] 0.0, 128
    %152 = vxpose.xlu0.b32.cont [15/16] 0.0, 128
    %153 = vxpose.xlu0.b32.end [16/16] 0.0, 128
    %v154 = vpop.trf.xlu0
    %v155 = vpop.trf.xlu0
    %v156 = vpop.trf.xlu0
    %v157 = vpop.trf.xlu0
    %v158 = vpop.trf.xlu0
    %v159 = vpop.trf.xlu0
    %v160 = vpop.trf.xlu0
    %v161 = vpop.trf.xlu0
    %v162 = vpop.trf.xlu0
    %v163 = vpop.trf.xlu0
    %v164 = vpop.trf.xlu0
    %v165 = vpop.trf.xlu0
    %v166 = vpop.trf.xlu0
    %v167 = vpop.trf.xlu0
    %v168 = vpop.trf.xlu0
    %v169 = vpop.trf.xlu0
    %v170 = vlaneseq
    %v171 = vshrl.u32 %v170, 7
    %v172 = vsub.s32 0, %v171
    %v173 = vrot.slane %v154, %v172
    %v174 = vadd.f32 %v131, %v173
    %v175 = vadd.f32 %v134, %v173
    %v176 = vadd.f32 %v137, %v173
    %v177 = vmul.f32 %v103, 2.0
    %v178 = vmul.f32 %v108, 2.0
    %v179 = vmul.f32 %v113, 2.0
    %v180 = vsub.f32 %v174, %v177
    %v181 = vsub.f32 %v175, %v178
    %v182 = vsub.f32 %v176, %v179
    %v183 = vmax.f32 %v180, 0.0
    %v184 = vmax.f32 %v181, 0.0
    %v185 = vmax.f32 %v182, 0.0
    %v186 = vrsqrt.pop %v183
    %v187 = vmul.f32 %v183, %v186
    %vm188 = vcmp.eq.f32.partialorder %v183, inf
    %v189 = vsel %vm188, %v183, %v187
    %vm190 = vcmp.eq.f32.partialorder %v183, 0.0
    %v191 = vand.u32 %v183, 2147483648
    %v192 = vsel %vm190, %v191, %v189
    %v193 = vrsqrt.pop %v184
    %v194 = vmul.f32 %v184, %v193
    %vm195 = vcmp.eq.f32.partialorder %v184, inf
    %v196 = vsel %vm195, %v184, %v194
    %vm197 = vcmp.eq.f32.partialorder %v184, 0.0
    %v198 = vand.u32 %v184, 2147483648
    %v199 = vsel %vm197, %v198, %v196
    %v200 = vrsqrt.pop %v185
    %v201 = vmul.f32 %v185, %v200
    %vm202 = vcmp.eq.f32.partialorder %v185, inf
    %v203 = vsel %vm202, %v185, %v201
    %vm204 = vcmp.eq.f32.partialorder %v185, 0.0
    %v205 = vand.u32 %v185, 2147483648
    %v206 = vsel %vm204, %v205, %v203
    %v207 = vsel %vm128, %v192, 0.0
    %208 = vadd.xlane.f32.xlu0 %v207
    %v209 = vpop.xlane.xlu0 %208
    %v210 = vsel %vm128, %v199, 0.0
    %211 = vadd.xlane.f32.xlu0 %v210
    %v212 = vpop.xlane.xlu0 %211
    %v213 = vsel %vm128, %v206, 0.0
    %214 = vadd.xlane.f32.xlu0 %v213
    %v215 = vpop.xlane.xlu0 %214
    %vm216 = vcmp.lt.s32.totalorder %v121, 8
    %v217 = vsel %vm216, %v192, 0.0
    %v218 = vsel %vm216, %v199, 0.0
    %v219 = vsel %vm216, %v206, 0.0
    %v220 = vsel %vm128, %v217, 0.0
    %221 = vadd.xlane.f32.xlu0 %v220
    %v222 = vpop.xlane.xlu0 %221
    %v223 = vsel %vm128, %v218, 0.0
    %224 = vadd.xlane.f32.xlu0 %v223
    %v225 = vpop.xlane.xlu0 %224
    %v226 = vsel %vm128, %v219, 0.0
    %227 = vadd.xlane.f32.xlu0 %v226
    %v228 = vpop.xlane.xlu0 %227
    %vm229 = vcmp.ge.s32.totalorder %v121, 8
    %vm230 = vcmp.lt.s32.totalorder %v121, 16
    %vm231 = vmand %vm229, %vm230
    %v232 = vsel %vm231, %v192, 0.0
    %v233 = vsel %vm231, %v199, 0.0
    %v234 = vsel %vm231, %v206, 0.0
    %v235 = vsel %vm128, %v232, 0.0
    %236 = vadd.xlane.f32.xlu0 %v235
    %v237 = vpop.xlane.xlu0 %236
    %v238 = vsel %vm128, %v233, 0.0
    %239 = vadd.xlane.f32.xlu0 %v238
    %v240 = vpop.xlane.xlu0 %239
    %v241 = vsel %vm128, %v234, 0.0
    %242 = vadd.xlane.f32.xlu0 %v241
    %v243 = vpop.xlane.xlu0 %242
    %v244 = vsub.f32 %v209, %v222
    %v245 = vsub.f32 %v212, %v225
    %v246 = vsub.f32 %v215, %v228
    %v247 = vsub.f32 %v244, %v237
    %v248 = vsub.f32 %v245, %v240
    %v249 = vsub.f32 %v246, %v243
    %vm250 = vcmask 7168
    %v251 = vsel %vm250, %v222, 0.0
    %252 = vadd.xlane.f32.xlu0 %v251
    %v253 = vpop.xlane.xlu0 %252
    %v254 = vrot.slane %v253, 4
    %v255 = vadd.f32 %v253, %v254
    %v256 = vrot.slane %v255, 2
    %v257 = vadd.f32 %v255, %v256
    %v258 = vrot.slane %v257, 1
    %v259 = vadd.f32 %v257, %v258
    %s260 = vtos %v259
    %v261 = vsel %vm250, %v237, 0.0
    %262 = vadd.xlane.f32.xlu0 %v261
    %v263 = vpop.xlane.xlu0 %262
    %v264 = vrot.slane %v263, 4
    %v265 = vadd.f32 %v263, %v264
    %v266 = vrot.slane %v265, 2
    %v267 = vadd.f32 %v265, %v266
    %v268 = vrot.slane %v267, 1
    %v269 = vadd.f32 %v267, %v268
    %s270 = vtos %v269
    %v271 = vsel %vm250, %v247, 0.0
    %272 = vadd.xlane.f32.xlu0 %v271
    %v273 = vpop.xlane.xlu0 %272
    %v274 = vrot.slane %v273, 4
    %v275 = vadd.f32 %v273, %v274
    %v276 = vrot.slane %v275, 2
    %v277 = vadd.f32 %v275, %v276
    %v278 = vrot.slane %v277, 1
    %v279 = vadd.f32 %v277, %v278
    %s280 = vtos %v279
    %v281 = vsel %vm250, %v240, 0.0
    %282 = vadd.xlane.f32.xlu0 %v281
    %v283 = vpop.xlane.xlu0 %282
    %v284 = vrot.slane %v283, 4
    %v285 = vadd.f32 %v283, %v284
    %v286 = vrot.slane %v285, 2
    %v287 = vadd.f32 %v285, %v286
    %v288 = vrot.slane %v287, 1
    %v289 = vadd.f32 %v287, %v288
    %s290 = vtos %v289
    %v291 = vsel %vm250, %v248, 0.0
    %292 = vadd.xlane.f32.xlu0 %v291
    %v293 = vpop.xlane.xlu0 %292
    %v294 = vrot.slane %v293, 4
    %v295 = vadd.f32 %v293, %v294
    %v296 = vrot.slane %v295, 2
    %v297 = vadd.f32 %v295, %v296
    %v298 = vrot.slane %v297, 1
    %v299 = vadd.f32 %v297, %v298
    %s300 = vtos %v299
    %v301 = vsel %vm250, %v249, 0.0
    %302 = vadd.xlane.f32.xlu0 %v301
    %v303 = vpop.xlane.xlu0 %302
    %v304 = vrot.slane %v303, 4
    %v305 = vadd.f32 %v303, %v304
    %v306 = vrot.slane %v305, 2
    %v307 = vadd.f32 %v305, %v306
    %v308 = vrot.slane %v307, 1
    %v309 = vadd.f32 %v307, %v308
    %s310 = vtos %v309
    %s311 = sadd.f32 %s260, %s290
    %s312 = smul.f32 %s311, 0.5
    %s313 = sadd.f32 %s312, %s270
    %v314 = vrcp.pop 120.0
    %s315 = vtos %v314
    %s316 = smul.f32 %s313, %s315
    %s317 = smul.f32 %s260, 2.0
    %s318 = sadd.f32 %s290, %s310
    %s319 = smul.f32 %s318, 0.5
    %s320 = sadd.f32 %s317, %s319
    %s321 = smul.f32 %s270, 2.0
    %s322 = sadd.f32 %s320, %s321
    %s323 = smul.f32 %s280, 2.0
    %s324 = sadd.f32 %s322, %s323
    %s325 = sadd.f32 %s324, %s300
    %v326 = vrcp.pop 496.0
    %s327 = vtos %v326
    %s328 = smul.f32 %s325, %s327
    %v329 = vsel %vm26, %v23, 0.0
    %330 = vadd.xlane.f32.xlu0 %v329
    %v331 = vpop.xlane.xlu0 %330
    %v332 = vrot.slane %v331, 4
    %v333 = vadd.f32 %v331, %v332
    %v334 = vrot.slane %v333, 2
    %v335 = vadd.f32 %v333, %v334
    %v336 = vrot.slane %v335, 1
    %v337 = vadd.f32 %v335, %v336
    %s338 = vtos %v337
    %v339 = vsel %vm26, %v24, 0.0
    %340 = vadd.xlane.f32.xlu0 %v339
    %v341 = vpop.xlane.xlu0 %340
    %v342 = vrot.slane %v341, 4
    %v343 = vadd.f32 %v341, %v342
    %v344 = vrot.slane %v343, 2
    %v345 = vadd.f32 %v343, %v344
    %v346 = vrot.slane %v345, 1
    %v347 = vadd.f32 %v345, %v346
    %s348 = vtos %v347
    %v349 = vsel %vm26, %v25, 0.0
    %350 = vadd.xlane.f32.xlu0 %v349
    %v351 = vpop.xlane.xlu0 %350
    %v352 = vrot.slane %v351, 4
    %v353 = vadd.f32 %v351, %v352
    %v354 = vrot.slane %v353, 2
    %v355 = vadd.f32 %v353, %v354
    %v356 = vrot.slane %v355, 1
    %v357 = vadd.f32 %v355, %v356
    %s358 = vtos %v357
    %v359 = vsel %vm250, %v131, 0.0
    %360 = vadd.xlane.f32.xlu0 %v359
    %v361 = vpop.xlane.xlu0 %360
    %v362 = vrot.slane %v361, 4
    %v363 = vadd.f32 %v361, %v362
    %v364 = vrot.slane %v363, 2
    %v365 = vadd.f32 %v363, %v364
    %v366 = vrot.slane %v365, 1
    %v367 = vadd.f32 %v365, %v366
    %s368 = vtos %v367
    %v369 = vsel %vm250, %v134, 0.0
    %370 = vadd.xlane.f32.xlu0 %v369
    %v371 = vpop.xlane.xlu0 %370
    %v372 = vrot.slane %v371, 4
    %v373 = vadd.f32 %v371, %v372
    %v374 = vrot.slane %v373, 2
    %v375 = vadd.f32 %v373, %v374
    %v376 = vrot.slane %v375, 1
    %v377 = vadd.f32 %v375, %v376
    %s378 = vtos %v377
    %v379 = vsel %vm250, %v137, 0.0
    %380 = vadd.xlane.f32.xlu0 %v379
    %v381 = vpop.xlane.xlu0 %380
    %v382 = vrot.slane %v381, 4
    %v383 = vadd.f32 %v381, %v382
    %v384 = vrot.slane %v383, 2
    %v385 = vadd.f32 %v383, %v384
    %v386 = vrot.slane %v385, 1
    %v387 = vadd.f32 %v385, %v386
    %s388 = vtos %v387
    %s389 = sadd.f32 %s338, %s348
    %s390 = sadd.f32 %s368, %s378
    %s391 = smul.f32 %s389, %s389
    %v392 = vrcp.pop 512.0
    %s393 = vtos %v392
    %s394 = smul.f32 %s391, %s393
    %s395 = ssub.f32 %s390, %s394
    %v396 = vrcp.pop 511.0
    %s397 = vtos %v396
    %s398 = smul.f32 %s395, %s397
    %s399 = smul.f32 %s338, 2.0
    %s400 = sadd.f32 %s399, %s348
    %s401 = sadd.f32 %s400, %s358
    %s402 = smul.f32 %s368, 2.0
    %s403 = sadd.f32 %s402, %s378
    %s404 = sadd.f32 %s403, %s388
    %s405 = smul.f32 %s401, %s401
    %v406 = vrcp.pop 1024.0
    %s407 = vtos %v406
    %s408 = smul.f32 %s405, %s407
    %s409 = ssub.f32 %s404, %s408
    %v410 = vrcp.pop 1023.0
    %s411 = vtos %v410
    %s412 = smul.f32 %s409, %s411
    %v413 = vsub.f32 %v23, %v24
    %v414 = vmul.f32 %v413, %v413
    %v415 = vsel %vm26, %v414, 0.0
    %416 = vadd.xlane.f32.xlu0 %v415
    %v417 = vpop.xlane.xlu0 %416
    %v418 = vrsqrt.pop %v417
    %v419 = vmul.f32 %v417, %v418
    %vm420 = vcmp.eq.f32.partialorder %v417, inf
    %v421 = vsel %vm420, %v417, %v419
    %vm422 = vcmp.eq.f32.partialorder %v417, 0.0
    %v423 = vand.u32 %v417, 2147483648
    %v424 = vsel %vm422, %v423, %v421
    %v425 = vsub.f32 %v23, %v25
    %v426 = vmul.f32 %v425, %v425
    %v427 = vsel %vm26, %v426, 0.0
    %428 = vadd.xlane.f32.xlu0 %v427
    %v429 = vpop.xlane.xlu0 %428
    %v430 = vrsqrt.pop %v429
    %v431 = vmul.f32 %v429, %v430
    %vm432 = vcmp.eq.f32.partialorder %v429, inf
    %v433 = vsel %vm432, %v429, %v431
    %vm434 = vcmp.eq.f32.partialorder %v429, 0.0
    %v435 = vand.u32 %v429, 2147483648
    %v436 = vsel %vm434, %v435, %v433
    %v437 = vstv %s316
    %v438 = vsub.f32 %v424, %v437
    %v439 = vmul.f32 %v438, 2.0
    %v440 = vstv %s398
    %v441 = vrcp.pop %v440
    %v442 = vmul.f32 %v439, %v441
    %v443 = vstv %s328
    %v444 = vsub.f32 %v436, %v443
    %v445 = vmul.f32 %v444, 2.0
    %v446 = vstv %s412
    %v447 = vrcp.pop %v446
    %v448 = vmul.f32 %v445, %v447
    %v449 = vsub.f32 %v442, %v448
    %v450 = vadd.f32 %v449, 0.1
    %v451 = vmax.f32 %v450, 0.0
    %v452 = vsel %vm250, %v451, 0.0
    %453 = vadd.xlane.f32.xlu0 %v452
    %v454 = vpop.xlane.xlu0 %453
    %v455 = vrot.slane %v454, 4
    %v456 = vadd.f32 %v454, %v455
    %v457 = vrot.slane %v456, 2
    %v458 = vadd.f32 %v456, %v457
    %v459 = vrot.slane %v458, 1
    %v460 = vadd.f32 %v458, %v459
    %s461 = vtos %v460
    %v462 = vrcp.pop 8.0
    %s463 = vtos %v462
    %s464 = smul.f32 %s461, %s463
    %s465 = scalar_lea.smem [#allocation5], 0
    %466 = sst [smem:[%s465]] %s464
    // Predicated region
    $region10: #{tpu_custom_call.1} parent=1 // pred_check
      _
    $region11: #{tpu_custom_call.1} parent=1 // pred_check_branch
      %468 = sbr.rel (0) target = $region13
    $region12: #{tpu_custom_call.1} parent=1 // pred_region
      %s470 = ssub.s32 16, 16
      %471 = vsyncadd [#allocation4], %s470
      %474 = dma.smem_to_hbm [#allocation5], 16, %s1, [#allocation4]
    $region13: #{tpu_custom_call.1} parent=1 // pred_fallthru
      _
    // Predicated region
    $region14: #{tpu_custom_call.1} parent=1 // pred_check
      _
    $region15: #{tpu_custom_call.1} parent=1 // pred_check_branch
      %476 = sbr.rel (0) target = $region17
    $region16: #{tpu_custom_call.1} parent=1 // pred_region
      %477 = dma.done [#allocation4], 16
    $region17: #{tpu_custom_call.1} parent=1 // pred_fallthru
      _
    %478 = sfence
    %479 = vsyncpa [#allocation3], 1
    %480 = vsyncpa [#allocation4], 1

</llo_original>
